<compile_context>
chip_gen: v6e
topology: v6e:2x2x1
jax: 0.10.0
libtpu: 0.0.40
codegen_flags: <defaults>
</compile_context>

<pallas_src>
import functools

import jax
import jax.numpy as jnp
from jax.experimental import pallas as pl
from jax.experimental.pallas import tpu as pltpu

H1_PAD = 128   # hidden1 width 20 padded to one full lane group
H2_PAD = 128   # hidden2 width 10 padded to one full lane group


def _round_up(x, m):
    return ((x + m - 1) // m) * m


def nhl_mlp_kernel(x_ref, w1_ref, b1_ref, w2_ref, b2_ref, w3_ref, b3_ref, o_ref):
    x = x_ref[...]                                                   # (TB, n_inputs)

    # hidden1 + ReLU  (lane-dense: padded weight columns are zero -> ReLU(0)=0)
    h1 = jnp.dot(x, w1_ref[...], preferred_element_type=jnp.float32) + b1_ref[...]
    h1 = jnp.maximum(h1, 0.0)                                        # (TB, 128) f32

    # hidden2 + ReLU  (padded rows/cols of w2 are zero)
    h2 = jnp.dot(h1, w2_ref[...], preferred_element_type=jnp.float32) + b2_ref[...]
    h2 = jnp.maximum(h2, 0.0)                                        # (TB, 128) f32

    # hidden3 (128 -> 1): VPU multiply + XLU row-reduce instead of an N=1 MXU pass.
    w3_row = w3_ref[...]                                             # (1, 128), zero-padded
    logits = jnp.sum(h2 * w3_row, axis=-1, keepdims=True) + b3_ref[...]   # (TB, 1)

    # Sigmoid goes to the EUP (its own bundle slot).
    o_ref[...] = jax.nn.sigmoid(logits).astype(o_ref.dtype)


def _pad_params_for_tpu(params):
    """Zero-pad hidden dims to 128 lanes; transpose w3 to a (1,128) row."""
    w1, b1 = params["w1"], params["b1"]          # (n_in, 20), (1, 20)
    w2, b2 = params["w2"], params["b2"]          # (20, 10),   (1, 10)
    w3, b3 = params["w3"], params["b3"]          # (10, 1),    (1, 1)

    n_in, h1 = w1.shape
    h2 = w2.shape[1]

    w1p = jnp.pad(w1, ((0, 0), (0, H1_PAD - h1)))
    b1p = jnp.pad(b1, ((0, 0), (0, H1_PAD - h1)))
    w2p = jnp.pad(w2, ((0, H1_PAD - h1), (0, H2_PAD - h2)))
    b2p = jnp.pad(b2, ((0, 0), (0, H2_PAD - h2)))
    w3p = jnp.pad(w3.T, ((0, 0), (0, H2_PAD - w3.shape[0])))          # (1, 128)
    return w1p, b1p, w2p, b2p, w3p, b3


@functools.partial(jax.jit, static_argnames=("tb", "use_bf16"))
def nhl_mlp_forward(x, params, *, tb=2048, use_bf16=False):
    """x: (B, n_inputs) float32.  params: dict of w1,b1,w2,b2,w3,b3 (PyTorch shapes)."""
    B, n_in = x.shape
    w1, b1, w2, b2, w3, b3 = _pad_params_for_tpu(params)

    # Batch tile: multiple of 8 sublanes, shrunk for small batches so we never pad
    # far past B.  At TB=2048 the double-buffered x tile + resident weights +
    # (TB,128) f32 intermediates total only a few MiB -> comfortably inside the
    # scoped-VMEM default on v5e/v6e/v7x, no vmem_limit_bytes override required.
    TB = min(tb, _round_up(B, 8))
    TB = _round_up(TB, 8)
    Bp = _round_up(B, TB)
    if Bp != B:
        x = jnp.pad(x, ((0, Bp - B), (0, 0)))     # extra rows sliced off below

    if use_bf16:
        # Halve the dominant HBM stream (X); f32 accumulation preserved in-kernel.
        x = x.astype(jnp.bfloat16)
        w1 = w1.astype(jnp.bfloat16)

    grid = (Bp // TB,)
    const = lambda a: pl.BlockSpec(a.shape, lambda i: (0,) * a.ndim)   # resident weights

    cost = pl.CostEstimate(
        flops=2 * Bp * (n_in * H1_PAD + H1_PAD * H2_PAD + H2_PAD),
        transcendentals=Bp,                                  # one sigmoid/exp per row
        bytes_accessed=x.size * x.dtype.itemsize
        + sum(a.size * a.dtype.itemsize for a in (w1, b1, w2, b2, w3, b3))
        + Bp * 4,
    )

    out = pl.pallas_call(
        nhl_mlp_kernel,
        out_shape=jax.ShapeDtypeStruct((Bp, 1), jnp.float32),
        grid=grid,
        in_specs=[
            pl.BlockSpec((TB, n_in), lambda i: (i, 0)),      # streamed, double-buffered
            const(w1), const(b1), const(w2), const(b2), const(w3), const(b3),
        ],
        out_specs=pl.BlockSpec((TB, 1), lambda i: (i, 0)),
        compiler_params=pltpu.CompilerParams(
            dimension_semantics=("parallel",),               # megacore split on v7x
        ),
        cost_estimate=cost,
    )(x, w1, b1, w2, b2, w3, b3)

    return out[:B]


def init_params(key, n_inputs):
    """Deterministic PyTorch-style uniform(-1/sqrt(fan_in), 1/sqrt(fan_in)) init."""
    def linear(key, fan_in, fan_out):
        kw, kb = jax.random.split(key)
        bound = 1.0 / jnp.sqrt(jnp.float32(fan_in))
        w = jax.random.uniform(kw, (fan_in, fan_out), jnp.float32, -bound, bound)
        b = jax.random.uniform(kb, (1, fan_out), jnp.float32, -bound, bound)
        return w, b

    k1, k2, k3 = jax.random.split(key, 3)
    w1, b1 = linear(k1, n_inputs, 20)
    w2, b2 = linear(k2, 20, 10)
    w3, b3 = linear(k3, 10, 1)
    return {"w1": w1, "b1": b1, "w2": w2, "b2": b2, "w3": w3, "b3": b3}


def reference_forward(x, p):
    h1 = jnp.maximum(x @ p["w1"] + p["b1"], 0.0)
    h2 = jnp.maximum(h1 @ p["w2"] + p["b2"], 0.0)
    return jax.nn.sigmoid(h2 @ p["w3"] + p["b3"])


if __name__ == "__main__":
    key = jax.random.PRNGKey(0)
    k_x, k_p = jax.random.split(key)

    # Small but multi-tile test: B=1000 with tb=256 gives a 4-step grid and
    # exercises the remainder-padding path; n_inputs=16 is a typical NHL
    # feature count.
    batch, n_inputs = 1000, 16
    x = jax.random.normal(k_x, (batch, n_inputs), jnp.float32)
    params = init_params(k_p, n_inputs)

    out = nhl_mlp_forward(x, params, tb=256)
    jax.block_until_ready(out)

    ref = reference_forward(x, params)
    assert out.shape == (batch, 1)
    assert jnp.allclose(out, ref, atol=1e-5, rtol=1e-5), float(jnp.max(jnp.abs(out - ref)))

    # Default (large-tile, single grid step here) path.
    out_default = nhl_mlp_forward(x, params)
    jax.block_until_ready(out_default)
    assert jnp.allclose(out_default, ref, atol=1e-5, rtol=1e-5)

    # Tiny-batch path (single small tile) also works.
    out_small = nhl_mlp_forward(x[:8], params)
    jax.block_until_ready(out_small)
    assert jnp.allclose(out_small, ref[:8], atol=1e-5, rtol=1e-5)

    print("KERNEL_OK")
</pallas_src>

<mosaic_0001>
module attributes {stable_mosaic.version = 11 : i64} {
  func.func @nhl_mlp_kernel(%arg0: i32, %arg1: memref<256x16xf32, #tpu.memory_space<vmem>>, %arg2: memref<16x128xf32, #tpu.memory_space<vmem>>, %arg3: memref<1x128xf32, #tpu.memory_space<vmem>>, %arg4: memref<128x128xf32, #tpu.memory_space<vmem>>, %arg5: memref<1x128xf32, #tpu.memory_space<vmem>>, %arg6: memref<1x128xf32, #tpu.memory_space<vmem>>, %arg7: memref<1x1xf32, #tpu.memory_space<vmem>>, %arg8: memref<256x1xf32, #tpu.memory_space<vmem>>) attributes {dimension_semantics = [#tpu.dimension_semantics<parallel>], iteration_bounds = array<i64: 4>, scalar_prefetch = 0 : i64, scratch_operands = 0 : i64, tpu.core_type = #tpu.core_type<tc>, window_params = [{transform_indices = @transform_0, window_bounds = array<i64: 256, 16>}, {pipeline_mode = #tpu.pipeline_mode<synchronous>, transform_indices = @transform_1, window_bounds = array<i64: 16, 128>}, {pipeline_mode = #tpu.pipeline_mode<synchronous>, transform_indices = @transform_2, window_bounds = array<i64: 1, 128>}, {pipeline_mode = #tpu.pipeline_mode<synchronous>, transform_indices = @transform_3, window_bounds = array<i64: 128, 128>}, {pipeline_mode = #tpu.pipeline_mode<synchronous>, transform_indices = @transform_4, window_bounds = array<i64: 1, 128>}, {pipeline_mode = #tpu.pipeline_mode<synchronous>, transform_indices = @transform_5, window_bounds = array<i64: 1, 128>}, {pipeline_mode = #tpu.pipeline_mode<synchronous>, transform_indices = @transform_6, window_bounds = array<i64: 1, 1>}, {transform_indices = @transform_7, window_bounds = array<i64: 256, 1>}]} {
    %c0 = arith.constant 0 : index
    %c0_0 = arith.constant 0 : index
    %0 = vector.load %arg1[%c0, %c0_0] : memref<256x16xf32, #tpu.memory_space<vmem>>, vector<256x16xf32>
    %c0_1 = arith.constant 0 : index
    %c0_2 = arith.constant 0 : index
    %1 = vector.load %arg2[%c0_1, %c0_2] : memref<16x128xf32, #tpu.memory_space<vmem>>, vector<16x128xf32>
    %cst = arith.constant dense<0.000000e+00> : vector<256x128xf32>
    %2 = tpu.matmul %0, %1, %cst {dimension_numbers = #tpu.dot_dimension_numbers<[1], [0], [0], [1], [0, 0, 1, 1], [], []>} : vector<256x16xf32>, vector<16x128xf32>, vector<256x128xf32> -> vector<256x128xf32>
    %c0_3 = arith.constant 0 : index
    %c0_4 = arith.constant 0 : index
    %3 = vector.load %arg3[%c0_3, %c0_4] : memref<1x128xf32, #tpu.memory_space<vmem>>, vector<1x128xf32>
    %4 = vector.broadcast %3 : vector<1x128xf32> to vector<256x128xf32>
    %5 = arith.addf %2, %4 : vector<256x128xf32>
    %cst_5 = arith.constant 0.000000e+00 : f32
    %6 = vector.broadcast %cst_5 : f32 to vector<256x128xf32>
    %7 = arith.maximumf %5, %6 : vector<256x128xf32>
    %c0_6 = arith.constant 0 : index
    %c0_7 = arith.constant 0 : index
    %8 = vector.load %arg4[%c0_6, %c0_7] : memref<128x128xf32, #tpu.memory_space<vmem>>, vector<128x128xf32>
    %cst_8 = arith.constant dense<0.000000e+00> : vector<256x128xf32>
    %9 = tpu.matmul %7, %8, %cst_8 {dimension_numbers = #tpu.dot_dimension_numbers<[1], [0], [0], [1], [0, 0, 1, 1], [], []>} : vector<256x128xf32>, vector<128x128xf32>, vector<256x128xf32> -> vector<256x128xf32>
    %c0_9 = arith.constant 0 : index
    %c0_10 = arith.constant 0 : index
    %10 = vector.load %arg5[%c0_9, %c0_10] : memref<1x128xf32, #tpu.memory_space<vmem>>, vector<1x128xf32>
    %11 = vector.broadcast %10 : vector<1x128xf32> to vector<256x128xf32>
    %12 = arith.addf %9, %11 : vector<256x128xf32>
    %cst_11 = arith.constant 0.000000e+00 : f32
    %13 = vector.broadcast %cst_11 : f32 to vector<256x128xf32>
    %14 = arith.maximumf %12, %13 : vector<256x128xf32>
    %c0_12 = arith.constant 0 : index
    %c0_13 = arith.constant 0 : index
    %15 = vector.load %arg6[%c0_12, %c0_13] : memref<1x128xf32, #tpu.memory_space<vmem>>, vector<1x128xf32>
    %16 = vector.broadcast %15 : vector<1x128xf32> to vector<256x128xf32>
    %17 = arith.mulf %14, %16 : vector<256x128xf32>
    %cst_14 = arith.constant dense<0.000000e+00> : vector<256xf32>
    %18 = vector.multi_reduction <add>, %17, %cst_14 [1] : vector<256x128xf32> to vector<256xf32>
    %19 = vector.shape_cast %18 : vector<256xf32> to vector<256x1xf32>
    %c0_15 = arith.constant 0 : index
    %c0_16 = arith.constant 0 : index
    %20 = vector.load %arg7[%c0_15, %c0_16] : memref<1x1xf32, #tpu.memory_space<vmem>>, vector<1x1xf32>
    %21 = vector.broadcast %20 : vector<1x1xf32> to vector<256x1xf32>
    %22 = arith.addf %19, %21 : vector<256x1xf32>
    %23 = arith.negf %22 : vector<256x1xf32>
    %24 = math.exp %23 : vector<256x1xf32>
    %cst_17 = arith.constant 1.000000e+00 : f32
    %25 = vector.broadcast %cst_17 : f32 to vector<256x1xf32>
    %26 = arith.addf %25, %24 : vector<256x1xf32>
    %27 = arith.divf %25, %26 : vector<256x1xf32>
    %c0_18 = arith.constant 0 : index
    %c0_19 = arith.constant 0 : index
    %28 = vector.load %arg8[%c0_18, %c0_19] : memref<256x1xf32, #tpu.memory_space<vmem>>, vector<256x1xf32>
    tpu.vector_store %arg8[%c0_18, %c0_19], %27 {strides = array<i32>} : memref<256x1xf32, #tpu.memory_space<vmem>>, vector<256x1xf32>,
    return
  }
  func.func @transform_0(%arg0: i32) -> (i32, i32) {
    %c0_i32 = arith.constant 0 : i32
    %c0_i32_0 = arith.constant 0 : i32
    return %arg0, %c0_i32 : i32, i32
  }
  func.func @transform_1(%arg0: i32) -> (i32, i32) {
    %c0_i32 = arith.constant 0 : i32
    %c0_i32_0 = arith.constant 0 : i32
    %c0_i32_1 = arith.constant 0 : i32
    return %c0_i32, %c0_i32_0 : i32, i32
  }
  func.func @transform_2(%arg0: i32) -> (i32, i32) {
    %c0_i32 = arith.constant 0 : i32
    %c0_i32_0 = arith.constant 0 : i32
    %c0_i32_1 = arith.constant 0 : i32
    return %c0_i32, %c0_i32_0 : i32, i32
  }
  func.func @transform_3(%arg0: i32) -> (i32, i32) {
    %c0_i32 = arith.constant 0 : i32
    %c0_i32_0 = arith.constant 0 : i32
    %c0_i32_1 = arith.constant 0 : i32
    return %c0_i32, %c0_i32_0 : i32, i32
  }
  func.func @transform_4(%arg0: i32) -> (i32, i32) {
    %c0_i32 = arith.constant 0 : i32
    %c0_i32_0 = arith.constant 0 : i32
    %c0_i32_1 = arith.constant 0 : i32
    return %c0_i32, %c0_i32_0 : i32, i32
  }
  func.func @transform_5(%arg0: i32) -> (i32, i32) {
    %c0_i32 = arith.constant 0 : i32
    %c0_i32_0 = arith.constant 0 : i32
    %c0_i32_1 = arith.constant 0 : i32
    return %c0_i32, %c0_i32_0 : i32, i32
  }
  func.func @transform_6(%arg0: i32) -> (i32, i32) {
    %c0_i32 = arith.constant 0 : i32
    %c0_i32_0 = arith.constant 0 : i32
    %c0_i32_1 = arith.constant 0 : i32
    return %c0_i32, %c0_i32_0 : i32, i32
  }
  func.func @transform_7(%arg0: i32) -> (i32, i32) {
    %c0_i32 = arith.constant 0 : i32
    %c0_i32_0 = arith.constant 0 : i32
    return %arg0, %c0_i32 : i32, i32
  }
}

</mosaic_0001>

<llo_original>
// kernel: nhl_mlp_forward.1
$region0: #{nhl_mlp_forward.1}
  #allocation0 [shape = 'u32[]', space=smem, size = 0x4, offset = 0x4, fixed_abs, tag = 'smem constant byte address 0x4 - core index']
  #allocation1 [shape = 'u32[144,128]{1,0:T(1,128)}', space=vmem, size = 0x12000, scoped, tag = 'internal scratch']
  #allocation2 [shape = 'f32[1,1]{1,0:T(1,128)S(1)}', space=vmem, size = 0x200, scoped, tag = 'scoped memory for nhl_mlp_forward.1']
  %s0 = inlined_call_operand.vmem [shape: f32[1024,16], index: 0, kind: input, shape index: {}]
  %s1 = inlined_call_operand.vmem [shape: f32[16,128], index: 1, kind: input, shape index: {}]
  %s2 = inlined_call_operand.vmem [shape: f32[1,128], index: 2, kind: input, shape index: {}]
  %s3 = inlined_call_operand.vmem [shape: f32[128,128], index: 3, kind: input, shape index: {}]
  %s4 = inlined_call_operand.vmem [shape: f32[1,128], index: 4, kind: input, shape index: {}]
  %s5 = inlined_call_operand.vmem [shape: f32[1,128], index: 5, kind: input, shape index: {}]
  %s6 = inlined_call_operand.<no memory space> [shape: f32[1,1], index: 6, kind: input, shape index: {}]
  %s7 = inlined_call_operand.vmem [shape: f32[1024,1], index: 7, kind: output, shape index: {}]
  %s8 = sld [smem:[#allocation0]]
  $region61: #{nhl_mlp_forward.1} parent=0
    _
  %s10 = ssub.s32 1, %s8
  %s11 = scalar_select 0, %s10, %s8
  %v12 = vstv %s6
  %13 = vst [vmem:[#allocation2] sm:$0x1] %v12
  loop: start=0, step=1, limit=6
  $region2: #{nhl_mlp_forward.1} parent=0 // loop_pre_header
    _
  $region3: #{nhl_mlp_forward.1} parent=0 // loop_header
    %s15 = sphi 0, %s19
    %p16 = scmp.ge.s32.totalorder %s15, 6
    %s25 = sphi 0, %s27
    %s28 = sphi 0, %s25
    %s29 = sphi 0, %s28
    %s45 = sphi 0, %s29
    %s49 = sphi 0, %s49
    %s51 = sphi 0, %s49
    %s52 = sphi 0, %s51
    %s66 = sphi 0, %s52
    %s70 = sphi 0, %s70
    %s72 = sphi 0, %s70
    %s73 = sphi 0, %s72
    %s87 = sphi 0, %s73
    %s91 = sphi 0, %s91
    %s93 = sphi 0, %s91
    %s94 = sphi 0, %s93
    %s108 = sphi 0, %s94
    %s112 = sphi 0, %s112
    %s114 = sphi 0, %s112
    %s115 = sphi 0, %s114
    %s129 = sphi 0, %s115
    %s133 = sphi 0, %s133
    %s135 = sphi 0, %s133
    %s136 = sphi 0, %s135
    %s150 = sphi 0, %s136
    %s154 = sphi 0, %s154
    %s156 = sphi 0, %s154
    %s157 = sphi 0, %s156
    %s171 = sphi 0, %s157
    %s177 = sphi 0, %s179
    %s180 = sphi 0, %s177
    %s181 = sphi 0, %s180
    %s197 = sphi 0, %s181
  $region4: #{nhl_mlp_forward.1} parent=0 // loop_header_branch
    %18 = sbr.rel (%p16) target = $region8
  $region5: #{nhl_mlp_forward.1} parent=0 // loop_body
    %s20 = ssub.s32 %s15, 1
    %s21 = ssub.s32 %s15, 2
    %s22 = sadd.s32 %s15, 1
    %s23 = ssub.s32 %s15, %s22
    %p24 = scmp.eq.s32.totalorder %s23, 0
    %s26 = sadd.s32 %s25, 1
    %s27 = scalar_select %p24, %s25, %s26
    %p30 = pneg %p24
    %p31 = scmp.eq.s32.totalorder %s15, 3
    %p32 = por %p30, %p31
    %p33 = scmp.ne.s32.totalorder %s25, %s28
    %p34 = scmp.eq.s32.totalorder %s15, 0
    %p35 = por %p33, %p34
    %p36 = scmp.ne.s32.totalorder %s25, %s28
    %p37 = scmp.eq.s32.totalorder %s20, 3
    %p38 = por %p36, %p37
    %p39 = scmp.ne.s32.totalorder %s28, %s29
    %p40 = scmp.eq.s32.totalorder %s20, 0
    %p41 = por %p39, %p40
    %p42 = scmp.ne.s32.totalorder %s28, %s29
    %p43 = scmp.eq.s32.totalorder %s21, 3
    %p44 = por %p42, %p43
    %p46 = scmp.ne.s32.totalorder %s29, %s45
    %p47 = scmp.eq.s32.totalorder %s21, 0
    %p48 = por %p46, %p47
    %s50 = sadd.s32 %s49, 1
    %p53 = scmp.eq.s32.totalorder %s15, 3
    %p54 = scmp.ne.s32.totalorder %s49, %s51
    %p55 = scmp.eq.s32.totalorder %s15, 0
    %p56 = por %p54, %p55
    %p57 = scmp.ne.s32.totalorder %s49, %s51
    %p58 = scmp.eq.s32.totalorder %s20, 3
    %p59 = por %p57, %p58
    %p60 = scmp.ne.s32.totalorder %s51, %s52
    %p61 = scmp.eq.s32.totalorder %s20, 0
    %p62 = por %p60, %p61
    %p63 = scmp.ne.s32.totalorder %s51, %s52
    %p64 = scmp.eq.s32.totalorder %s21, 3
    %p65 = por %p63, %p64
    %p67 = scmp.ne.s32.totalorder %s52, %s66
    %p68 = scmp.eq.s32.totalorder %s21, 0
    %p69 = por %p67, %p68
    %s71 = sadd.s32 %s70, 1
    %p74 = scmp.eq.s32.totalorder %s15, 3
    %p75 = scmp.ne.s32.totalorder %s70, %s72
    %p76 = scmp.eq.s32.totalorder %s15, 0
    %p77 = por %p75, %p76
    %p78 = scmp.ne.s32.totalorder %s70, %s72
    %p79 = scmp.eq.s32.totalorder %s20, 3
    %p80 = por %p78, %p79
    %p81 = scmp.ne.s32.totalorder %s72, %s73
    %p82 = scmp.eq.s32.totalorder %s20, 0
    %p83 = por %p81, %p82
    %p84 = scmp.ne.s32.totalorder %s72, %s73
    %p85 = scmp.eq.s32.totalorder %s21, 3
    %p86 = por %p84, %p85
    %p88 = scmp.ne.s32.totalorder %s73, %s87
    %p89 = scmp.eq.s32.totalorder %s21, 0
    %p90 = por %p88, %p89
    %s92 = sadd.s32 %s91, 1
    %p95 = scmp.eq.s32.totalorder %s15, 3
    %p96 = scmp.ne.s32.totalorder %s91, %s93
    %p97 = scmp.eq.s32.totalorder %s15, 0
    %p98 = por %p96, %p97
    %p99 = scmp.ne.s32.totalorder %s91, %s93
    %p100 = scmp.eq.s32.totalorder %s20, 3
    %p101 = por %p99, %p100
    %p102 = scmp.ne.s32.totalorder %s93, %s94
    %p103 = scmp.eq.s32.totalorder %s20, 0
    %p104 = por %p102, %p103
    %p105 = scmp.ne.s32.totalorder %s93, %s94
    %p106 = scmp.eq.s32.totalorder %s21, 3
    %p107 = por %p105, %p106
    %p109 = scmp.ne.s32.totalorder %s94, %s108
    %p110 = scmp.eq.s32.totalorder %s21, 0
    %p111 = por %p109, %p110
    %s113 = sadd.s32 %s112, 1
    %p116 = scmp.eq.s32.totalorder %s15, 3
    %p117 = scmp.ne.s32.totalorder %s112, %s114
    %p118 = scmp.eq.s32.totalorder %s15, 0
    %p119 = por %p117, %p118
    %p120 = scmp.ne.s32.totalorder %s112, %s114
    %p121 = scmp.eq.s32.totalorder %s20, 3
    %p122 = por %p120, %p121
    %p123 = scmp.ne.s32.totalorder %s114, %s115
    %p124 = scmp.eq.s32.totalorder %s20, 0
    %p125 = por %p123, %p124
    %p126 = scmp.ne.s32.totalorder %s114, %s115
    %p127 = scmp.eq.s32.totalorder %s21, 3
    %p128 = por %p126, %p127
    %p130 = scmp.ne.s32.totalorder %s115, %s129
    %p131 = scmp.eq.s32.totalorder %s21, 0
    %p132 = por %p130, %p131
    %s134 = sadd.s32 %s133, 1
    %p137 = scmp.eq.s32.totalorder %s15, 3
    %p138 = scmp.ne.s32.totalorder %s133, %s135
    %p139 = scmp.eq.s32.totalorder %s15, 0
    %p140 = por %p138, %p139
    %p141 = scmp.ne.s32.totalorder %s133, %s135
    %p142 = scmp.eq.s32.totalorder %s20, 3
    %p143 = por %p141, %p142
    %p144 = scmp.ne.s32.totalorder %s135, %s136
    %p145 = scmp.eq.s32.totalorder %s20, 0
    %p146 = por %p144, %p145
    %p147 = scmp.ne.s32.totalorder %s135, %s136
    %p148 = scmp.eq.s32.totalorder %s21, 3
    %p149 = por %p147, %p148
    %p151 = scmp.ne.s32.totalorder %s136, %s150
    %p152 = scmp.eq.s32.totalorder %s21, 0
    %p153 = por %p151, %p152
    %s155 = sadd.s32 %s154, 1
    %p158 = scmp.eq.s32.totalorder %s15, 3
    %p159 = scmp.ne.s32.totalorder %s154, %s156
    %p160 = scmp.eq.s32.totalorder %s15, 0
    %p161 = por %p159, %p160
    %p162 = scmp.ne.s32.totalorder %s154, %s156
    %p163 = scmp.eq.s32.totalorder %s20, 3
    %p164 = por %p162, %p163
    %p165 = scmp.ne.s32.totalorder %s156, %s157
    %p166 = scmp.eq.s32.totalorder %s20, 0
    %p167 = por %p165, %p166
    %p168 = scmp.ne.s32.totalorder %s156, %s157
    %p169 = scmp.eq.s32.totalorder %s21, 3
    %p170 = por %p168, %p169
    %p172 = scmp.ne.s32.totalorder %s157, %s171
    %p173 = scmp.eq.s32.totalorder %s21, 0
    %p174 = por %p172, %p173
    %s175 = ssub.s32 %s15, %s22
    %p176 = scmp.eq.s32.totalorder %s175, 0
    %s178 = sadd.s32 %s177, 1
    %s179 = scalar_select %p176, %s177, %s178
    %p182 = pneg %p176
    %p183 = scmp.eq.s32.totalorder %s15, 3
    %p184 = por %p182, %p183
    %p185 = scmp.ne.s32.totalorder %s177, %s180
    %p186 = scmp.eq.s32.totalorder %s15, 0
    %p187 = por %p185, %p186
    %p188 = scmp.ne.s32.totalorder %s177, %s180
    %p189 = scmp.eq.s32.totalorder %s20, 3
    %p190 = por %p188, %p189
    %p191 = scmp.ne.s32.totalorder %s180, %s181
    %p192 = scmp.eq.s32.totalorder %s20, 0
    %p193 = por %p191, %p192
    %p194 = scmp.ne.s32.totalorder %s180, %s181
    %p195 = scmp.eq.s32.totalorder %s21, 3
    %p196 = por %p194, %p195
    %p198 = scmp.ne.s32.totalorder %s181, %s197
    %p199 = scmp.eq.s32.totalorder %s21, 0
    %p200 = por %p198, %p199
    %p201 = scmp.le.s32.totalorder 1, %s15
    %p202 = scmp.lt.s32.totalorder %s15, 5
    %p203 = pnand %p201, %p202
    %p204 = pneg %p203
    // Predicated region
    $region9: #{nhl_mlp_forward.1} parent=5 // pred_check
      _
    $region10: #{nhl_mlp_forward.1} parent=5 // pred_check_branch
      %206 = sbr.rel (%p203) target = $region12
    $region11: #{nhl_mlp_forward.1} parent=5 // pred_region
      %s207 = ssub.s32 %s15, 1
      // Predicated region
      $region13: #{nhl_mlp_forward.1} parent=11 // pred_check
        %p208 = pneg %p62
      $region14: #{nhl_mlp_forward.1} parent=11 // pred_check_branch
        %210 = sbr.rel (%p208) target = $region16
      $region15: #{nhl_mlp_forward.1} parent=11 // pred_region
        _
      $region16: #{nhl_mlp_forward.1} parent=11 // pred_fallthru
        _
      // Predicated region
      $region17: #{nhl_mlp_forward.1} parent=11 // pred_check
        %p211 = pneg %p83
      $region18: #{nhl_mlp_forward.1} parent=11 // pred_check_branch
        %213 = sbr.rel (%p211) target = $region20
      $region19: #{nhl_mlp_forward.1} parent=11 // pred_region
        _
      $region20: #{nhl_mlp_forward.1} parent=11 // pred_fallthru
        _
      // Predicated region
      $region21: #{nhl_mlp_forward.1} parent=11 // pred_check
        %p214 = pneg %p104
      $region22: #{nhl_mlp_forward.1} parent=11 // pred_check_branch
        %216 = sbr.rel (%p214) target = $region24
      $region23: #{nhl_mlp_forward.1} parent=11 // pred_region
        _
      $region24: #{nhl_mlp_forward.1} parent=11 // pred_fallthru
        _
      // Predicated region
      $region25: #{nhl_mlp_forward.1} parent=11 // pred_check
        %p217 = pneg %p125
      $region26: #{nhl_mlp_forward.1} parent=11 // pred_check_branch
        %219 = sbr.rel (%p217) target = $region28
      $region27: #{nhl_mlp_forward.1} parent=11 // pred_region
        _
      $region28: #{nhl_mlp_forward.1} parent=11 // pred_fallthru
        _
      // Predicated region
      $region29: #{nhl_mlp_forward.1} parent=11 // pred_check
        %p220 = pneg %p146
      $region30: #{nhl_mlp_forward.1} parent=11 // pred_check_branch
        %222 = sbr.rel (%p220) target = $region32
      $region31: #{nhl_mlp_forward.1} parent=11 // pred_region
        _
      $region32: #{nhl_mlp_forward.1} parent=11 // pred_fallthru
        _
      // Predicated region
      $region33: #{nhl_mlp_forward.1} parent=11 // pred_check
        %p223 = pneg %p167
      $region34: #{nhl_mlp_forward.1} parent=11 // pred_check_branch
        %225 = sbr.rel (%p223) target = $region36
      $region35: #{nhl_mlp_forward.1} parent=11 // pred_region
        _
      $region36: #{nhl_mlp_forward.1} parent=11 // pred_fallthru
        _
    $region12: #{nhl_mlp_forward.1} parent=5 // pred_fallthru
      _
    %p226 = scmp.lt.s32.totalorder %s15, 4
    // Predicated region
    $region37: #{nhl_mlp_forward.1} parent=5 // pred_check
      %p227 = pneg %p226
    $region38: #{nhl_mlp_forward.1} parent=5 // pred_check_branch
      %229 = sbr.rel (%p227) target = $region40
    $region39: #{nhl_mlp_forward.1} parent=5 // pred_region
      // Predicated region
      $region41: #{nhl_mlp_forward.1} parent=39 // pred_check
        %p230 = pneg %p35
      $region42: #{nhl_mlp_forward.1} parent=39 // pred_check_branch
        %232 = sbr.rel (%p230) target = $region44
      $region43: #{nhl_mlp_forward.1} parent=39 // pred_region
        %s233 = smul.u32 32, %s15
        %p234 = scmp.lt.s32.totalorder %s233, 127
        %s235 = scalar_select %p234, %s233, 127
        %s236 = smul.addr %s235, 8
        %s237 = scalar_lea.vmem %s0, %s236
        %s238 = smul.u32 32, %s15
      $region44: #{nhl_mlp_forward.1} parent=39 // pred_fallthru
        _
    $region40: #{nhl_mlp_forward.1} parent=5 // pred_fallthru
      _
    %p239 = scmp.le.s32.totalorder 1, %s15
    %p240 = scmp.lt.s32.totalorder %s15, 5
    %p241 = pnand %p239, %p240
    %p242 = pneg %p241
    // Predicated region
    $region45: #{nhl_mlp_forward.1} parent=5 // pred_check
      _
    $region46: #{nhl_mlp_forward.1} parent=5 // pred_check_branch
      %244 = sbr.rel (%p241) target = $region48
    $region47: #{nhl_mlp_forward.1} parent=5 // pred_region
      %s245 = ssub.s32 %s15, 1
      %s246 = smul.u32 32, %s20
      %p247 = scmp.lt.s32.totalorder %s246, 127
      %s248 = scalar_select %p247, %s246, 127
      %s249 = smul.addr %s248, 8
      %s250 = scalar_lea.vmem %s0, %s249
      %p251 = pneg %p41
      %p252 = pneg %p38
      %p253 = pneg %p62
      %p254 = pneg %p59
      %p255 = pneg %p83
      %p256 = pneg %p80
      %p257 = pneg %p104
      %p258 = pneg %p101
      %p259 = pneg %p125
      %p260 = pneg %p122
      %p261 = pneg %p146
      %p262 = pneg %p143
      %p263 = pneg %p167
      %p264 = pneg %p164
      %p265 = pneg %p193
      %p266 = pneg %p190
      %s267 = smul.u32 32, %s20
      %p268 = scmp.lt.s32.totalorder %s267, 127
      %s269 = scalar_select %p268, %s267, 127
      %s270 = smul.addr %s269, 8
      %s271 = scalar_lea.vmem %s7, %s270
      %s272 = smul.u32 32, %s20
      %p273 = scmp.lt.s32.totalorder %s272, 127
      %s274 = scalar_select %p273, %s272, 127
      %s275 = smul.addr %s274, 8
      %s276 = scalar_lea.vmem %s0, %s275
      %s277 = smul.u32 32, %s20
      %s278 = smul.u32 32, %s20
      %p279 = scmp.lt.s32.totalorder %s278, 127
      %s280 = scalar_select %p279, %s278, 127
      %s281 = smul.addr %s280, 8
      %s282 = scalar_lea.vmem %s7, %s281
      %s283 = smul.u32 32, %s20
      %v284 = vld [vmem:[%s276] sm:$0xff]
      %v285 = vld [vmem:[%s276 + $0x8] sm:$0xff]
      %v286 = vld [vmem:[%s276 + $0x10] sm:$0xff]
      %v287 = vld [vmem:[%s276 + $0x18] sm:$0xff]
      %v288 = vld [vmem:[%s276 + $0x20] sm:$0xff]
      %v289 = vld [vmem:[%s276 + $0x28] sm:$0xff]
      %v290 = vld [vmem:[%s276 + $0x30] sm:$0xff]
      %v291 = vld [vmem:[%s276 + $0x38] sm:$0xff]
      %v292 = vld [vmem:[%s276 + $0x40] sm:$0xff]
      %v293 = vld [vmem:[%s276 + $0x48] sm:$0xff]
      %v294 = vld [vmem:[%s276 + $0x50] sm:$0xff]
      %v295 = vld [vmem:[%s276 + $0x58] sm:$0xff]
      %v296 = vld [vmem:[%s276 + $0x60] sm:$0xff]
      %v297 = vld [vmem:[%s276 + $0x68] sm:$0xff]
      %v298 = vld [vmem:[%s276 + $0x70] sm:$0xff]
      %v299 = vld [vmem:[%s276 + $0x78] sm:$0xff]
      %v300 = vld [vmem:[%s276 + $0x80] sm:$0xff]
      %v301 = vld [vmem:[%s276 + $0x88] sm:$0xff]
      %v302 = vld [vmem:[%s276 + $0x90] sm:$0xff]
      %v303 = vld [vmem:[%s276 + $0x98] sm:$0xff]
      %v304 = vld [vmem:[%s276 + $0xa0] sm:$0xff]
      %v305 = vld [vmem:[%s276 + $0xa8] sm:$0xff]
      %v306 = vld [vmem:[%s276 + $0xb0] sm:$0xff]
      %v307 = vld [vmem:[%s276 + $0xb8] sm:$0xff]
      %v308 = vld [vmem:[%s276 + $0xc0] sm:$0xff]
      %v309 = vld [vmem:[%s276 + $0xc8] sm:$0xff]
      %v310 = vld [vmem:[%s276 + $0xd0] sm:$0xff]
      %v311 = vld [vmem:[%s276 + $0xd8] sm:$0xff]
      %v312 = vld [vmem:[%s276 + $0xe0] sm:$0xff]
      %v313 = vld [vmem:[%s276 + $0xe8] sm:$0xff]
      %v314 = vld [vmem:[%s276 + $0xf0] sm:$0xff]
      %v315 = vld [vmem:[%s276 + $0xf8] sm:$0xff]
      %v316 = vld [vmem:[%s1] sm:$0xff]
      %v317 = vld [vmem:[%s1 + $0x8] sm:$0xff]
      %v318 = vld [vmem:[%s2] sm:$0x1]
      %v320 = vlaneseq
      %v321 = vshrl.u32 %v320, 7
      %v322 = vsub.s32 0, %v321
      %v323 = vrot.slane %v318, %v322
      %vm325 = vcmask 130048
      %v327 = vsel %vm325, %v284, 0
      %v330 = vsel %vm325, %v285, 0
      %v333 = vsel %vm325, %v286, 0
      %v336 = vsel %vm325, %v287, 0
      %v339 = vsel %vm325, %v288, 0
      %v342 = vsel %vm325, %v289, 0
      %v345 = vsel %vm325, %v290, 0
      %v348 = vsel %vm325, %v291, 0
      %v351 = vsel %vm325, %v292, 0
      %v354 = vsel %vm325, %v293, 0
      %v357 = vsel %vm325, %v294, 0
      %v360 = vsel %vm325, %v295, 0
      %v363 = vsel %vm325, %v296, 0
      %v366 = vsel %vm325, %v297, 0
      %v369 = vsel %vm325, %v298, 0
      %v372 = vsel %vm325, %v299, 0
      %v375 = vsel %vm325, %v300, 0
      %v378 = vsel %vm325, %v301, 0
      %v381 = vsel %vm325, %v302, 0
      %v384 = vsel %vm325, %v303, 0
      %v387 = vsel %vm325, %v304, 0
      %v390 = vsel %vm325, %v305, 0
      %v393 = vsel %vm325, %v306, 0
      %v396 = vsel %vm325, %v307, 0
      %v399 = vsel %vm325, %v308, 0
      %v402 = vsel %vm325, %v309, 0
      %v405 = vsel %vm325, %v310, 0
      %v408 = vsel %vm325, %v311, 0
      %v411 = vsel %vm325, %v312, 0
      %v414 = vsel %vm325, %v313, 0
      %v417 = vsel %vm325, %v314, 0
      %v420 = vsel %vm325, %v315, 0
      %422 = vmatprep.subr.mxu0 0.0
      %423 = vmatpush1.msra.mxu0 0.0
      %424 = vmatprep.subr.mxu0 0.0
      %425 = vmatpush1.msra.mxu0 0.0
      %426 = vmatprep.subr.mxu0 0.0
      %427 = vmatpush1.msra.mxu0 0.0
      %428 = vmatprep.subr.mxu0 0.0
      %429 = vmatpush1.msra.mxu0 0.0
      %430 = vmatprep.subr.mxu0 0.0
      %431 = vmatpush1.msra.mxu0 0.0
      %432 = vmatprep.subr.mxu0 0.0
      %433 = vmatpush1.msra.mxu0 0.0
      %434 = vmatprep.subr.mxu0 0.0
      %435 = vmatpush1.msra.mxu0 0.0
      %436 = vmatprep.subr.mxu0 0.0
      %437 = vmatpush1.msra.mxu0 0.0
      %438 = vmatprep.subr.mxu0 0.0
      %439 = vmatpush1.msra.mxu0 0.0
      %440 = vmatprep.subr.mxu0 0.0
      %441 = vmatpush1.msra.mxu0 0.0
      %442 = vmatprep.subr.mxu0 0.0
      %443 = vmatpush1.msra.mxu0 0.0
      %444 = vmatprep.subr.mxu0 0.0
      %445 = vmatpush1.msra.mxu0 0.0
      %446 = vmatprep.subr.mxu0 0.0
      %447 = vmatpush1.msra.mxu0 0.0
      %448 = vmatprep.subr.mxu0 0.0
      %449 = vmatpush1.msra.mxu0 0.0
      %450 = vmatprep.subr.mxu0 0.0
      %451 = vmatpush1.msra.mxu0 %v317
      %452 = vmatprep.subr.mxu0 0.0
      %453 = vmatpush1.msra.mxu0 %v316
      %454 = vmatprep.subr.mxu0 0.0
      %455 = vmatpush2.msra.mxu0 0.0
      %456 = vmatprep.subr.mxu0 0.0
      %457 = vmatpush2.msra.mxu0 0.0
      %458 = vmatprep.subr.mxu0 0.0
      %459 = vmatpush2.msra.mxu0 0.0
      %460 = vmatprep.subr.mxu0 0.0
      %461 = vmatpush2.msra.mxu0 0.0
      %462 = vmatprep.subr.mxu0 0.0
      %463 = vmatpush2.msra.mxu0 0.0
      %464 = vmatprep.subr.mxu0 0.0
      %465 = vmatpush2.msra.mxu0 0.0
      %466 = vmatprep.subr.mxu0 0.0
      %467 = vmatpush2.msra.mxu0 0.0
      %468 = vmatprep.subr.mxu0 0.0
      %469 = vmatpush2.msra.mxu0 0.0
      %470 = vmatprep.subr.mxu0 0.0
      %471 = vmatpush2.msra.mxu0 0.0
      %472 = vmatprep.subr.mxu0 0.0
      %473 = vmatpush2.msra.mxu0 0.0
      %474 = vmatprep.subr.mxu0 0.0
      %475 = vmatpush2.msra.mxu0 0.0
      %476 = vmatprep.subr.mxu0 0.0
      %477 = vmatpush2.msra.mxu0 0.0
      %478 = vmatprep.subr.mxu0 0.0
      %479 = vmatpush2.msra.mxu0 0.0
      %480 = vmatprep.subr.mxu0 0.0
      %481 = vmatpush2.msra.mxu0 0.0
      %482 = vmatprep.subr.mxu0 0.0
      %483 = vmatpush2.msra.mxu0 0.0
      %484 = vmatprep.subr.mxu0 0.0
      %485 = vmatpush2.msra.mxu0 0.0
      %486 = vmatprep.mubr.f32.mxu0 0.0
      %487 = vmatmul.mubr.f32.gmra.mxu0 %v327
      %v488 = vpop.f32.mrf.mxu0
      %v489 = vadd.f32 %v323, %v488
      %v490 = vpop.f32.mrf.mxu0
      %491 = vmatprep.mubr.f32.mxu0 0.0
      %492 = vmatmul.mubr.f32.gmra.mxu0 %v330
      %v493 = vpop.f32.mrf.mxu0
      %v494 = vadd.f32 %v323, %v493
      %v495 = vpop.f32.mrf.mxu0
      %496 = vmatprep.mubr.f32.mxu0 0.0
      %497 = vmatmul.mubr.f32.gmra.mxu0 %v333
      %v498 = vpop.f32.mrf.mxu0
      %v499 = vadd.f32 %v323, %v498
      %v500 = vpop.f32.mrf.mxu0
      %501 = vmatprep.mubr.f32.mxu0 0.0
      %502 = vmatmul.mubr.f32.gmra.mxu0 %v336
      %v503 = vpop.f32.mrf.mxu0
      %v504 = vadd.f32 %v323, %v503
      %v505 = vpop.f32.mrf.mxu0
      %506 = vmatprep.mubr.f32.mxu0 0.0
      %507 = vmatmul.mubr.f32.gmra.mxu0 %v339
      %v508 = vpop.f32.mrf.mxu0
      %v509 = vadd.f32 %v323, %v508
      %v510 = vpop.f32.mrf.mxu0
      %511 = vmatprep.mubr.f32.mxu0 0.0
      %512 = vmatmul.mubr.f32.gmra.mxu0 %v342
      %v513 = vpop.f32.mrf.mxu0
      %v514 = vadd.f32 %v323, %v513
      %v515 = vpop.f32.mrf.mxu0
      %516 = vmatprep.mubr.f32.mxu0 0.0
      %517 = vmatmul.mubr.f32.gmra.mxu0 %v345
      %v518 = vpop.f32.mrf.mxu0
      %v519 = vadd.f32 %v323, %v518
      %v520 = vpop.f32.mrf.mxu0
      %521 = vmatprep.mubr.f32.mxu0 0.0
      %522 = vmatmul.mubr.f32.gmra.mxu0 %v348
      %v523 = vpop.f32.mrf.mxu0
      %v524 = vadd.f32 %v323, %v523
      %v525 = vpop.f32.mrf.mxu0
      %526 = vmatprep.mubr.f32.mxu0 0.0
      %527 = vmatmul.mubr.f32.gmra.mxu0 %v351
      %v528 = vpop.f32.mrf.mxu0
      %v529 = vadd.f32 %v323, %v528
      %v530 = vpop.f32.mrf.mxu0
      %531 = vmatprep.mubr.f32.mxu0 0.0
      %532 = vmatmul.mubr.f32.gmra.mxu0 %v354
      %v533 = vpop.f32.mrf.mxu0
      %v534 = vadd.f32 %v323, %v533
      %v535 = vpop.f32.mrf.mxu0
      %536 = vmatprep.mubr.f32.mxu0 0.0
      %537 = vmatmul.mubr.f32.gmra.mxu0 %v357
      %v538 = vpop.f32.mrf.mxu0
      %v539 = vadd.f32 %v323, %v538
      %v540 = vpop.f32.mrf.mxu0
      %541 = vmatprep.mubr.f32.mxu0 0.0
      %542 = vmatmul.mubr.f32.gmra.mxu0 %v360
      %v543 = vpop.f32.mrf.mxu0
      %v544 = vadd.f32 %v323, %v543
      %v545 = vpop.f32.mrf.mxu0
      %546 = vmatprep.mubr.f32.mxu0 0.0
      %547 = vmatmul.mubr.f32.gmra.mxu0 %v363
      %v548 = vpop.f32.mrf.mxu0
      %v549 = vadd.f32 %v323, %v548
      %v550 = vpop.f32.mrf.mxu0
      %551 = vmatprep.mubr.f32.mxu0 0.0
      %552 = vmatmul.mubr.f32.gmra.mxu0 %v366
      %v553 = vpop.f32.mrf.mxu0
      %v554 = vadd.f32 %v323, %v553
      %v555 = vpop.f32.mrf.mxu0
      %556 = vmatprep.mubr.f32.mxu0 0.0
      %557 = vmatmul.mubr.f32.gmra.mxu0 %v369
      %v558 = vpop.f32.mrf.mxu0
      %v559 = vadd.f32 %v323, %v558
      %v560 = vpop.f32.mrf.mxu0
      %561 = vmatprep.mubr.f32.mxu0 0.0
      %562 = vmatmul.mubr.f32.gmra.mxu0 %v372
      %v563 = vpop.f32.mrf.mxu0
      %v564 = vadd.f32 %v323, %v563
      %v565 = vpop.f32.mrf.mxu0
      %566 = vmatprep.mubr.f32.mxu0 0.0
      %567 = vmatmul.mubr.f32.gmra.mxu0 %v375
      %v568 = vpop.f32.mrf.mxu0
      %v569 = vadd.f32 %v323, %v568
      %v570 = vpop.f32.mrf.mxu0
      %571 = vmatprep.mubr.f32.mxu0 0.0
      %572 = vmatmul.mubr.f32.gmra.mxu0 %v378
      %v573 = vpop.f32.mrf.mxu0
      %v574 = vadd.f32 %v323, %v573
      %v575 = vpop.f32.mrf.mxu0
      %576 = vmatprep.mubr.f32.mxu0 0.0
      %577 = vmatmul.mubr.f32.gmra.mxu0 %v381
      %v578 = vpop.f32.mrf.mxu0
      %v579 = vadd.f32 %v323, %v578
      %v580 = vpop.f32.mrf.mxu0
      %581 = vmatprep.mubr.f32.mxu0 0.0
      %582 = vmatmul.mubr.f32.gmra.mxu0 %v384
      %v583 = vpop.f32.mrf.mxu0
      %v584 = vadd.f32 %v323, %v583
      %v585 = vpop.f32.mrf.mxu0
      %586 = vmatprep.mubr.f32.mxu0 0.0
      %587 = vmatmul.mubr.f32.gmra.mxu0 %v387
      %v588 = vpop.f32.mrf.mxu0
      %v589 = vadd.f32 %v323, %v588
      %v590 = vpop.f32.mrf.mxu0
      %591 = vmatprep.mubr.f32.mxu0 0.0
      %592 = vmatmul.mubr.f32.gmra.mxu0 %v390
      %v593 = vpop.f32.mrf.mxu0
      %v594 = vadd.f32 %v323, %v593
      %v595 = vpop.f32.mrf.mxu0
      %596 = vmatprep.mubr.f32.mxu0 0.0
      %597 = vmatmul.mubr.f32.gmra.mxu0 %v393
      %v598 = vpop.f32.mrf.mxu0
      %v599 = vadd.f32 %v323, %v598
      %v600 = vpop.f32.mrf.mxu0
      %601 = vmatprep.mubr.f32.mxu0 0.0
      %602 = vmatmul.mubr.f32.gmra.mxu0 %v396
      %v603 = vpop.f32.mrf.mxu0
      %v604 = vadd.f32 %v323, %v603
      %v605 = vpop.f32.mrf.mxu0
      %606 = vmatprep.mubr.f32.mxu0 0.0
      %607 = vmatmul.mubr.f32.gmra.mxu0 %v399
      %v608 = vpop.f32.mrf.mxu0
      %v609 = vadd.f32 %v323, %v608
      %v610 = vpop.f32.mrf.mxu0
      %611 = vmatprep.mubr.f32.mxu0 0.0
      %612 = vmatmul.mubr.f32.gmra.mxu0 %v402
      %v613 = vpop.f32.mrf.mxu0
      %v614 = vadd.f32 %v323, %v613
      %v615 = vpop.f32.mrf.mxu0
      %616 = vmatprep.mubr.f32.mxu0 0.0
      %617 = vmatmul.mubr.f32.gmra.mxu0 %v405
      %v618 = vpop.f32.mrf.mxu0
      %v619 = vadd.f32 %v323, %v618
      %v620 = vpop.f32.mrf.mxu0
      %621 = vmatprep.mubr.f32.mxu0 0.0
      %622 = vmatmul.mubr.f32.gmra.mxu0 %v408
      %v623 = vpop.f32.mrf.mxu0
      %v624 = vadd.f32 %v323, %v623
      %v625 = vpop.f32.mrf.mxu0
      %626 = vmatprep.mubr.f32.mxu0 0.0
      %627 = vmatmul.mubr.f32.gmra.mxu0 %v411
      %v628 = vpop.f32.mrf.mxu0
      %v629 = vadd.f32 %v323, %v628
      %v630 = vpop.f32.mrf.mxu0
      %631 = vmatprep.mubr.f32.mxu0 0.0
      %632 = vmatmul.mubr.f32.gmra.mxu0 %v414
      %v633 = vpop.f32.mrf.mxu0
      %v634 = vadd.f32 %v323, %v633
      %v635 = vpop.f32.mrf.mxu0
      %636 = vmatprep.mubr.f32.mxu0 0.0
      %637 = vmatmul.mubr.f32.gmra.mxu0 %v417
      %v638 = vpop.f32.mrf.mxu0
      %v639 = vadd.f32 %v323, %v638
      %v640 = vpop.f32.mrf.mxu0
      %641 = vmatprep.mubr.f32.mxu0 0.0
      %642 = vmatmul.mubr.f32.gmra.mxu0 %v420
      %v643 = vpop.f32.mrf.mxu0
      %v644 = vadd.f32 %v323, %v643
      %v645 = vpop.f32.mrf.mxu0
      %646 = vdwg.mxu0
      %v647 = vmax.f32 %v489, 0.0
      %v648 = vmax.f32 %v494, 0.0
      %v649 = vmax.f32 %v499, 0.0
      %v650 = vmax.f32 %v504, 0.0
      %v651 = vmax.f32 %v509, 0.0
      %v652 = vmax.f32 %v514, 0.0
      %v653 = vmax.f32 %v519, 0.0
      %v654 = vmax.f32 %v524, 0.0
      %v655 = vmax.f32 %v529, 0.0
      %v656 = vmax.f32 %v534, 0.0
      %v657 = vmax.f32 %v539, 0.0
      %v658 = vmax.f32 %v544, 0.0
      %v659 = vmax.f32 %v549, 0.0
      %v660 = vmax.f32 %v554, 0.0
      %v661 = vmax.f32 %v559, 0.0
      %v662 = vmax.f32 %v564, 0.0
      %v663 = vmax.f32 %v569, 0.0
      %v664 = vmax.f32 %v574, 0.0
      %v665 = vmax.f32 %v579, 0.0
      %v666 = vmax.f32 %v584, 0.0
      %v667 = vmax.f32 %v589, 0.0
      %v668 = vmax.f32 %v594, 0.0
      %v669 = vmax.f32 %v599, 0.0
      %v670 = vmax.f32 %v604, 0.0
      %v671 = vmax.f32 %v609, 0.0
      %v672 = vmax.f32 %v614, 0.0
      %v673 = vmax.f32 %v619, 0.0
      %v674 = vmax.f32 %v624, 0.0
      %v675 = vmax.f32 %v629, 0.0
      %v676 = vmax.f32 %v634, 0.0
      %v677 = vmax.f32 %v639, 0.0
      %v678 = vmax.f32 %v644, 0.0
      %v679 = vld [vmem:[%s3] sm:$0xff]
      %v680 = vld [vmem:[%s3 + $0x8] sm:$0xff]
      %v681 = vld [vmem:[%s3 + $0x10] sm:$0xff]
      %v682 = vld [vmem:[%s3 + $0x18] sm:$0xff]
      %v683 = vld [vmem:[%s3 + $0x20] sm:$0xff]
      %v684 = vld [vmem:[%s3 + $0x28] sm:$0xff]
      %v685 = vld [vmem:[%s3 + $0x30] sm:$0xff]
      %v686 = vld [vmem:[%s3 + $0x38] sm:$0xff]
      %v687 = vld [vmem:[%s3 + $0x40] sm:$0xff]
      %v688 = vld [vmem:[%s3 + $0x48] sm:$0xff]
      %v689 = vld [vmem:[%s3 + $0x50] sm:$0xff]
      %v690 = vld [vmem:[%s3 + $0x58] sm:$0xff]
      %v691 = vld [vmem:[%s3 + $0x60] sm:$0xff]
      %v692 = vld [vmem:[%s3 + $0x68] sm:$0xff]
      %v693 = vld [vmem:[%s3 + $0x70] sm:$0xff]
      %v694 = vld [vmem:[%s3 + $0x78] sm:$0xff]
      %v695 = vld [vmem:[%s4] sm:$0x1]
      %v697 = vlaneseq
      %v698 = vshrl.u32 %v697, 7
      %v699 = vsub.s32 0, %v698
      %v700 = vrot.slane %v695, %v699
      %702 = vmatprep.subr.mxu0 0.0
      %703 = vmatpush1.msra.mxu0 %v694
      %704 = vmatprep.subr.mxu0 0.0
      %705 = vmatpush1.msra.mxu0 %v693
      %706 = vmatprep.subr.mxu0 0.0
      %707 = vmatpush1.msra.mxu0 %v692
      %708 = vmatprep.subr.mxu0 0.0
      %709 = vmatpush1.msra.mxu0 %v691
      %710 = vmatprep.subr.mxu0 0.0
      %711 = vmatpush1.msra.mxu0 %v690
      %712 = vmatprep.subr.mxu0 0.0
      %713 = vmatpush1.msra.mxu0 %v689
      %714 = vmatprep.subr.mxu0 0.0
      %715 = vmatpush1.msra.mxu0 %v688
      %716 = vmatprep.subr.mxu0 0.0
      %717 = vmatpush1.msra.mxu0 %v687
      %718 = vmatprep.subr.mxu0 0.0
      %719 = vmatpush1.msra.mxu0 %v686
      %720 = vmatprep.subr.mxu0 0.0
      %721 = vmatpush1.msra.mxu0 %v685
      %722 = vmatprep.subr.mxu0 0.0
      %723 = vmatpush1.msra.mxu0 %v684
      %724 = vmatprep.subr.mxu0 0.0
      %725 = vmatpush1.msra.mxu0 %v683
      %726 = vmatprep.subr.mxu0 0.0
      %727 = vmatpush1.msra.mxu0 %v682
      %728 = vmatprep.subr.mxu0 0.0
      %729 = vmatpush1.msra.mxu0 %v681
      %730 = vmatprep.subr.mxu0 0.0
      %731 = vmatpush1.msra.mxu0 %v680
      %732 = vmatprep.subr.mxu0 0.0
      %733 = vmatpush1.msra.mxu0 %v679
      %734 = vmatprep.subr.mxu0 0.0
      %735 = vmatpush2.msra.mxu0 0.0
      %736 = vmatprep.subr.mxu0 0.0
      %737 = vmatpush2.msra.mxu0 0.0
      %738 = vmatprep.subr.mxu0 0.0
      %739 = vmatpush2.msra.mxu0 0.0
      %740 = vmatprep.subr.mxu0 0.0
      %741 = vmatpush2.msra.mxu0 0.0
      %742 = vmatprep.subr.mxu0 0.0
      %743 = vmatpush2.msra.mxu0 0.0
      %744 = vmatprep.subr.mxu0 0.0
      %745 = vmatpush2.msra.mxu0 0.0
      %746 = vmatprep.subr.mxu0 0.0
      %747 = vmatpush2.msra.mxu0 0.0
      %748 = vmatprep.subr.mxu0 0.0
      %749 = vmatpush2.msra.mxu0 0.0
      %750 = vmatprep.subr.mxu0 0.0
      %751 = vmatpush2.msra.mxu0 0.0
      %752 = vmatprep.subr.mxu0 0.0
      %753 = vmatpush2.msra.mxu0 0.0
      %754 = vmatprep.subr.mxu0 0.0
      %755 = vmatpush2.msra.mxu0 0.0
      %756 = vmatprep.subr.mxu0 0.0
      %757 = vmatpush2.msra.mxu0 0.0
      %758 = vmatprep.subr.mxu0 0.0
      %759 = vmatpush2.msra.mxu0 0.0
      %760 = vmatprep.subr.mxu0 0.0
      %761 = vmatpush2.msra.mxu0 0.0
      %762 = vmatprep.subr.mxu0 0.0
      %763 = vmatpush2.msra.mxu0 0.0
      %764 = vmatprep.subr.mxu0 0.0
      %765 = vmatpush2.msra.mxu0 0.0
      %766 = vmatprep.mubr.f32.mxu0 0.0
      %767 = vmatmul.mubr.f32.gmra.mxu0 %v647
      %v768 = vpop.f32.mrf.mxu0
      %v769 = vadd.f32 %v700, %v768
      %v770 = vpop.f32.mrf.mxu0
      %771 = vmatprep.mubr.f32.mxu0 0.0
      %772 = vmatmul.mubr.f32.gmra.mxu0 %v648
      %v773 = vpop.f32.mrf.mxu0
      %v774 = vadd.f32 %v700, %v773
      %v775 = vpop.f32.mrf.mxu0
      %776 = vmatprep.mubr.f32.mxu0 0.0
      %777 = vmatmul.mubr.f32.gmra.mxu0 %v649
      %v778 = vpop.f32.mrf.mxu0
      %v779 = vadd.f32 %v700, %v778
      %v780 = vpop.f32.mrf.mxu0
      %781 = vmatprep.mubr.f32.mxu0 0.0
      %782 = vmatmul.mubr.f32.gmra.mxu0 %v650
      %v783 = vpop.f32.mrf.mxu0
      %v784 = vadd.f32 %v700, %v783
      %v785 = vpop.f32.mrf.mxu0
      %786 = vmatprep.mubr.f32.mxu0 0.0
      %787 = vmatmul.mubr.f32.gmra.mxu0 %v651
      %v788 = vpop.f32.mrf.mxu0
      %v789 = vadd.f32 %v700, %v788
      %v790 = vpop.f32.mrf.mxu0
      %791 = vmatprep.mubr.f32.mxu0 0.0
      %792 = vmatmul.mubr.f32.gmra.mxu0 %v652
      %v793 = vpop.f32.mrf.mxu0
      %v794 = vadd.f32 %v700, %v793
      %v795 = vpop.f32.mrf.mxu0
      %796 = vmatprep.mubr.f32.mxu0 0.0
      %797 = vmatmul.mubr.f32.gmra.mxu0 %v653
      %v798 = vpop.f32.mrf.mxu0
      %v799 = vadd.f32 %v700, %v798
      %v800 = vpop.f32.mrf.mxu0
      %801 = vmatprep.mubr.f32.mxu0 0.0
      %802 = vmatmul.mubr.f32.gmra.mxu0 %v654
      %v803 = vpop.f32.mrf.mxu0
      %v804 = vadd.f32 %v700, %v803
      %v805 = vpop.f32.mrf.mxu0
      %806 = vmatprep.mubr.f32.mxu0 0.0
      %807 = vmatmul.mubr.f32.gmra.mxu0 %v655
      %v808 = vpop.f32.mrf.mxu0
      %v809 = vadd.f32 %v700, %v808
      %v810 = vpop.f32.mrf.mxu0
      %811 = vmatprep.mubr.f32.mxu0 0.0
      %812 = vmatmul.mubr.f32.gmra.mxu0 %v656
      %v813 = vpop.f32.mrf.mxu0
      %v814 = vadd.f32 %v700, %v813
      %v815 = vpop.f32.mrf.mxu0
      %816 = vmatprep.mubr.f32.mxu0 0.0
      %817 = vmatmul.mubr.f32.gmra.mxu0 %v657
      %v818 = vpop.f32.mrf.mxu0
      %v819 = vadd.f32 %v700, %v818
      %v820 = vpop.f32.mrf.mxu0
      %821 = vmatprep.mubr.f32.mxu0 0.0
      %822 = vmatmul.mubr.f32.gmra.mxu0 %v658
      %v823 = vpop.f32.mrf.mxu0
      %v824 = vadd.f32 %v700, %v823
      %v825 = vpop.f32.mrf.mxu0
      %826 = vmatprep.mubr.f32.mxu0 0.0
      %827 = vmatmul.mubr.f32.gmra.mxu0 %v659
      %v828 = vpop.f32.mrf.mxu0
      %v829 = vadd.f32 %v700, %v828
      %v830 = vpop.f32.mrf.mxu0
      %831 = vmatprep.mubr.f32.mxu0 0.0
      %832 = vmatmul.mubr.f32.gmra.mxu0 %v660
      %v833 = vpop.f32.mrf.mxu0
      %v834 = vadd.f32 %v700, %v833
      %v835 = vpop.f32.mrf.mxu0
      %836 = vmatprep.mubr.f32.mxu0 0.0
      %837 = vmatmul.mubr.f32.gmra.mxu0 %v661
      %v838 = vpop.f32.mrf.mxu0
      %v839 = vadd.f32 %v700, %v838
      %v840 = vpop.f32.mrf.mxu0
      %841 = vmatprep.mubr.f32.mxu0 0.0
      %842 = vmatmul.mubr.f32.gmra.mxu0 %v662
      %v843 = vpop.f32.mrf.mxu0
      %v844 = vadd.f32 %v700, %v843
      %v845 = vpop.f32.mrf.mxu0
      %846 = vmatprep.mubr.f32.mxu0 0.0
      %847 = vmatmul.mubr.f32.gmra.mxu0 %v663
      %v848 = vpop.f32.mrf.mxu0
      %v849 = vadd.f32 %v700, %v848
      %v850 = vpop.f32.mrf.mxu0
      %851 = vmatprep.mubr.f32.mxu0 0.0
      %852 = vmatmul.mubr.f32.gmra.mxu0 %v664
      %v853 = vpop.f32.mrf.mxu0
      %v854 = vadd.f32 %v700, %v853
      %v855 = vpop.f32.mrf.mxu0
      %856 = vmatprep.mubr.f32.mxu0 0.0
      %857 = vmatmul.mubr.f32.gmra.mxu0 %v665
      %v858 = vpop.f32.mrf.mxu0
      %v859 = vadd.f32 %v700, %v858
      %v860 = vpop.f32.mrf.mxu0
      %861 = vmatprep.mubr.f32.mxu0 0.0
      %862 = vmatmul.mubr.f32.gmra.mxu0 %v666
      %v863 = vpop.f32.mrf.mxu0
      %v864 = vadd.f32 %v700, %v863
      %v865 = vpop.f32.mrf.mxu0
      %866 = vmatprep.mubr.f32.mxu0 0.0
      %867 = vmatmul.mubr.f32.gmra.mxu0 %v667
      %v868 = vpop.f32.mrf.mxu0
      %v869 = vadd.f32 %v700, %v868
      %v870 = vpop.f32.mrf.mxu0
      %871 = vmatprep.mubr.f32.mxu0 0.0
      %872 = vmatmul.mubr.f32.gmra.mxu0 %v668
      %v873 = vpop.f32.mrf.mxu0
      %v874 = vadd.f32 %v700, %v873
      %v875 = vpop.f32.mrf.mxu0
      %876 = vmatprep.mubr.f32.mxu0 0.0
      %877 = vmatmul.mubr.f32.gmra.mxu0 %v669
      %v878 = vpop.f32.mrf.mxu0
      %v879 = vadd.f32 %v700, %v878
      %v880 = vpop.f32.mrf.mxu0
      %881 = vmatprep.mubr.f32.mxu0 0.0
      %882 = vmatmul.mubr.f32.gmra.mxu0 %v670
      %v883 = vpop.f32.mrf.mxu0
      %v884 = vadd.f32 %v700, %v883
      %v885 = vpop.f32.mrf.mxu0
      %886 = vmatprep.mubr.f32.mxu0 0.0
      %887 = vmatmul.mubr.f32.gmra.mxu0 %v671
      %v888 = vpop.f32.mrf.mxu0
      %v889 = vadd.f32 %v700, %v888
      %v890 = vpop.f32.mrf.mxu0
      %891 = vmatprep.mubr.f32.mxu0 0.0
      %892 = vmatmul.mubr.f32.gmra.mxu0 %v672
      %v893 = vpop.f32.mrf.mxu0
      %v894 = vadd.f32 %v700, %v893
      %v895 = vpop.f32.mrf.mxu0
      %896 = vmatprep.mubr.f32.mxu0 0.0
      %897 = vmatmul.mubr.f32.gmra.mxu0 %v673
      %v898 = vpop.f32.mrf.mxu0
      %v899 = vadd.f32 %v700, %v898
      %v900 = vpop.f32.mrf.mxu0
      %901 = vmatprep.mubr.f32.mxu0 0.0
      %902 = vmatmul.mubr.f32.gmra.mxu0 %v674
      %v903 = vpop.f32.mrf.mxu0
      %v904 = vadd.f32 %v700, %v903
      %v905 = vpop.f32.mrf.mxu0
      %906 = vmatprep.mubr.f32.mxu0 0.0
      %907 = vmatmul.mubr.f32.gmra.mxu0 %v675
      %v908 = vpop.f32.mrf.mxu0
      %v909 = vadd.f32 %v700, %v908
      %v910 = vpop.f32.mrf.mxu0
      %911 = vmatprep.mubr.f32.mxu0 0.0
      %912 = vmatmul.mubr.f32.gmra.mxu0 %v676
      %v913 = vpop.f32.mrf.mxu0
      %v914 = vadd.f32 %v700, %v913
      %v915 = vpop.f32.mrf.mxu0
      %916 = vmatprep.mubr.f32.mxu0 0.0
      %917 = vmatmul.mubr.f32.gmra.mxu0 %v677
      %v918 = vpop.f32.mrf.mxu0
      %v919 = vadd.f32 %v700, %v918
      %v920 = vpop.f32.mrf.mxu0
      %921 = vmatprep.mubr.f32.mxu0 0.0
      %922 = vmatmul.mubr.f32.gmra.mxu0 %v678
      %v923 = vpop.f32.mrf.mxu0
      %v924 = vadd.f32 %v700, %v923
      %v925 = vpop.f32.mrf.mxu0
      %926 = vdwg.mxu0
      %v927 = vmax.f32 %v769, 0.0
      %v928 = vmax.f32 %v774, 0.0
      %v929 = vmax.f32 %v779, 0.0
      %v930 = vmax.f32 %v784, 0.0
      %v931 = vmax.f32 %v789, 0.0
      %v932 = vmax.f32 %v794, 0.0
      %v933 = vmax.f32 %v799, 0.0
      %v934 = vmax.f32 %v804, 0.0
      %v935 = vmax.f32 %v809, 0.0
      %v936 = vmax.f32 %v814, 0.0
      %v937 = vmax.f32 %v819, 0.0
      %v938 = vmax.f32 %v824, 0.0
      %v939 = vmax.f32 %v829, 0.0
      %v940 = vmax.f32 %v834, 0.0
      %v941 = vmax.f32 %v839, 0.0
      %v942 = vmax.f32 %v844, 0.0
      %v943 = vmax.f32 %v849, 0.0
      %v944 = vmax.f32 %v854, 0.0
      %v945 = vmax.f32 %v859, 0.0
      %v946 = vmax.f32 %v864, 0.0
      %v947 = vmax.f32 %v869, 0.0
      %v948 = vmax.f32 %v874, 0.0
      %v949 = vmax.f32 %v879, 0.0
      %v950 = vmax.f32 %v884, 0.0
      %v951 = vmax.f32 %v889, 0.0
      %v952 = vmax.f32 %v894, 0.0
      %v953 = vmax.f32 %v899, 0.0
      %v954 = vmax.f32 %v904, 0.0
      %v955 = vmax.f32 %v909, 0.0
      %v956 = vmax.f32 %v914, 0.0
      %v957 = vmax.f32 %v919, 0.0
      %v958 = vmax.f32 %v924, 0.0
      %v959 = vld [vmem:[%s5] sm:$0x1]
      %v961 = vlaneseq
      %v962 = vshrl.u32 %v961, 7
      %v963 = vsub.s32 0, %v962
      %v964 = vrot.slane %v959, %v963
      %v966 = vmul.f32 %v927, %v964
      %v967 = vmul.f32 %v928, %v964
      %v968 = vmul.f32 %v929, %v964
      %v969 = vmul.f32 %v930, %v964
      %v970 = vmul.f32 %v931, %v964
      %v971 = vmul.f32 %v932, %v964
      %v972 = vmul.f32 %v933, %v964
      %v973 = vmul.f32 %v934, %v964
      %v974 = vmul.f32 %v935, %v964
      %v975 = vmul.f32 %v936, %v964
      %v976 = vmul.f32 %v937, %v964
      %v977 = vmul.f32 %v938, %v964
      %v978 = vmul.f32 %v939, %v964
      %v979 = vmul.f32 %v940, %v964
      %v980 = vmul.f32 %v941, %v964
      %v981 = vmul.f32 %v942, %v964
      %v982 = vmul.f32 %v943, %v964
      %v983 = vmul.f32 %v944, %v964
      %v984 = vmul.f32 %v945, %v964
      %v985 = vmul.f32 %v946, %v964
      %v986 = vmul.f32 %v947, %v964
      %v987 = vmul.f32 %v948, %v964
      %v988 = vmul.f32 %v949, %v964
      %v989 = vmul.f32 %v950, %v964
      %v990 = vmul.f32 %v951, %v964
      %v991 = vmul.f32 %v952, %v964
      %v992 = vmul.f32 %v953, %v964
      %v993 = vmul.f32 %v954, %v964
      %v994 = vmul.f32 %v955, %v964
      %v995 = vmul.f32 %v956, %v964
      %v996 = vmul.f32 %v957, %v964
      %v997 = vmul.f32 %v958, %v964
      %998 = vadd.xlane.f32.xlu0 %v966
      %v999 = vpop.xlane.xlu0 %998
      %1000 = vadd.xlane.f32.xlu0 %v967
      %v1001 = vpop.xlane.xlu0 %1000
      %1002 = vadd.xlane.f32.xlu0 %v968
      %v1003 = vpop.xlane.xlu0 %1002
      %1004 = vadd.xlane.f32.xlu0 %v969
      %v1005 = vpop.xlane.xlu0 %1004
      %1006 = vadd.xlane.f32.xlu0 %v970
      %v1007 = vpop.xlane.xlu0 %1006
      %1008 = vadd.xlane.f32.xlu0 %v971
      %v1009 = vpop.xlane.xlu0 %1008
      %1010 = vadd.xlane.f32.xlu0 %v972
      %v1011 = vpop.xlane.xlu0 %1010
      %1012 = vadd.xlane.f32.xlu0 %v973
      %v1013 = vpop.xlane.xlu0 %1012
      %1014 = vadd.xlane.f32.xlu0 %v974
      %v1015 = vpop.xlane.xlu0 %1014
      %1016 = vadd.xlane.f32.xlu0 %v975
      %v1017 = vpop.xlane.xlu0 %1016
      %1018 = vadd.xlane.f32.xlu0 %v976
      %v1019 = vpop.xlane.xlu0 %1018
      %1020 = vadd.xlane.f32.xlu0 %v977
      %v1021 = vpop.xlane.xlu0 %1020
      %1022 = vadd.xlane.f32.xlu0 %v978
      %v1023 = vpop.xlane.xlu0 %1022
      %1024 = vadd.xlane.f32.xlu0 %v979
      %v1025 = vpop.xlane.xlu0 %1024
      %1026 = vadd.xlane.f32.xlu0 %v980
      %v1027 = vpop.xlane.xlu0 %1026
      %1028 = vadd.xlane.f32.xlu0 %v981
      %v1029 = vpop.xlane.xlu0 %1028
      %1030 = vadd.xlane.f32.xlu0 %v982
      %v1031 = vpop.xlane.xlu0 %1030
      %1032 = vadd.xlane.f32.xlu0 %v983
      %v1033 = vpop.xlane.xlu0 %1032
      %1034 = vadd.xlane.f32.xlu0 %v984
      %v1035 = vpop.xlane.xlu0 %1034
      %1036 = vadd.xlane.f32.xlu0 %v985
      %v1037 = vpop.xlane.xlu0 %1036
      %1038 = vadd.xlane.f32.xlu0 %v986
      %v1039 = vpop.xlane.xlu0 %1038
      %1040 = vadd.xlane.f32.xlu0 %v987
      %v1041 = vpop.xlane.xlu0 %1040
      %1042 = vadd.xlane.f32.xlu0 %v988
      %v1043 = vpop.xlane.xlu0 %1042
      %1044 = vadd.xlane.f32.xlu0 %v989
      %v1045 = vpop.xlane.xlu0 %1044
      %1046 = vadd.xlane.f32.xlu0 %v990
      %v1047 = vpop.xlane.xlu0 %1046
      %1048 = vadd.xlane.f32.xlu0 %v991
      %v1049 = vpop.xlane.xlu0 %1048
      %1050 = vadd.xlane.f32.xlu0 %v992
      %v1051 = vpop.xlane.xlu0 %1050
      %1052 = vadd.xlane.f32.xlu0 %v993
      %v1053 = vpop.xlane.xlu0 %1052
      %1054 = vadd.xlane.f32.xlu0 %v994
      %v1055 = vpop.xlane.xlu0 %1054
      %1056 = vadd.xlane.f32.xlu0 %v995
      %v1057 = vpop.xlane.xlu0 %1056
      %1058 = vadd.xlane.f32.xlu0 %v996
      %v1059 = vpop.xlane.xlu0 %1058
      %1060 = vadd.xlane.f32.xlu0 %v997
      %v1061 = vpop.xlane.xlu0 %1060
      %v1062 = vld [vmem:[#allocation2] sm:$0x1]
      %v1064 = vlaneseq
      %v1065 = vshrl.u32 %v1064, 7
      %v1066 = vsub.s32 0, %v1065
      %v1067 = vrot.slane %v1062, %v1066
      %v1069 = vadd.f32 %v999, %v1067
      %v1070 = vadd.f32 %v1001, %v1067
      %v1071 = vadd.f32 %v1003, %v1067
      %v1072 = vadd.f32 %v1005, %v1067
      %v1073 = vadd.f32 %v1007, %v1067
      %v1074 = vadd.f32 %v1009, %v1067
      %v1075 = vadd.f32 %v1011, %v1067
      %v1076 = vadd.f32 %v1013, %v1067
      %v1077 = vadd.f32 %v1015, %v1067
      %v1078 = vadd.f32 %v1017, %v1067
      %v1079 = vadd.f32 %v1019, %v1067
      %v1080 = vadd.f32 %v1021, %v1067
      %v1081 = vadd.f32 %v1023, %v1067
      %v1082 = vadd.f32 %v1025, %v1067
      %v1083 = vadd.f32 %v1027, %v1067
      %v1084 = vadd.f32 %v1029, %v1067
      %v1085 = vadd.f32 %v1031, %v1067
      %v1086 = vadd.f32 %v1033, %v1067
      %v1087 = vadd.f32 %v1035, %v1067
      %v1088 = vadd.f32 %v1037, %v1067
      %v1089 = vadd.f32 %v1039, %v1067
      %v1090 = vadd.f32 %v1041, %v1067
      %v1091 = vadd.f32 %v1043, %v1067
      %v1092 = vadd.f32 %v1045, %v1067
      %v1093 = vadd.f32 %v1047, %v1067
      %v1094 = vadd.f32 %v1049, %v1067
      %v1095 = vadd.f32 %v1051, %v1067
      %v1096 = vadd.f32 %v1053, %v1067
      %v1097 = vadd.f32 %v1055, %v1067
      %v1098 = vadd.f32 %v1057, %v1067
      %v1099 = vadd.f32 %v1059, %v1067
      %v1100 = vadd.f32 %v1061, %v1067
      %v1101 = vxor.u32 %v1069, 2147483648
      %v1102 = vxor.u32 %v1070, 2147483648
      %v1103 = vxor.u32 %v1071, 2147483648
      %v1104 = vxor.u32 %v1072, 2147483648
      %v1105 = vxor.u32 %v1073, 2147483648
      %v1106 = vxor.u32 %v1074, 2147483648
      %v1107 = vxor.u32 %v1075, 2147483648
      %v1108 = vxor.u32 %v1076, 2147483648
      %v1109 = vxor.u32 %v1077, 2147483648
      %v1110 = vxor.u32 %v1078, 2147483648
      %v1111 = vxor.u32 %v1079, 2147483648
      %v1112 = vxor.u32 %v1080, 2147483648
      %v1113 = vxor.u32 %v1081, 2147483648
      %v1114 = vxor.u32 %v1082, 2147483648
      %v1115 = vxor.u32 %v1083, 2147483648
      %v1116 = vxor.u32 %v1084, 2147483648
      %v1117 = vxor.u32 %v1085, 2147483648
      %v1118 = vxor.u32 %v1086, 2147483648
      %v1119 = vxor.u32 %v1087, 2147483648
      %v1120 = vxor.u32 %v1088, 2147483648
      %v1121 = vxor.u32 %v1089, 2147483648
      %v1122 = vxor.u32 %v1090, 2147483648
      %v1123 = vxor.u32 %v1091, 2147483648
      %v1124 = vxor.u32 %v1092, 2147483648
      %v1125 = vxor.u32 %v1093, 2147483648
      %v1126 = vxor.u32 %v1094, 2147483648
      %v1127 = vxor.u32 %v1095, 2147483648
      %v1128 = vxor.u32 %v1096, 2147483648
      %v1129 = vxor.u32 %v1097, 2147483648
      %v1130 = vxor.u32 %v1098, 2147483648
      %v1131 = vxor.u32 %v1099, 2147483648
      %v1132 = vxor.u32 %v1100, 2147483648
      %v1133 = vmul.f32 %v1101, 1.442695
      %v1134 = vpow.pop %v1133
      %v1135 = vmul.f32 %v1102, 1.442695
      %v1136 = vpow.pop %v1135
      %v1137 = vmul.f32 %v1103, 1.442695
      %v1138 = vpow.pop %v1137
      %v1139 = vmul.f32 %v1104, 1.442695
      %v1140 = vpow.pop %v1139
      %v1141 = vmul.f32 %v1105, 1.442695
      %v1142 = vpow.pop %v1141
      %v1143 = vmul.f32 %v1106, 1.442695
      %v1144 = vpow.pop %v1143
      %v1145 = vmul.f32 %v1107, 1.442695
      %v1146 = vpow.pop %v1145
      %v1147 = vmul.f32 %v1108, 1.442695
      %v1148 = vpow.pop %v1147
      %v1149 = vmul.f32 %v1109, 1.442695
      %v1150 = vpow.pop %v1149
      %v1151 = vmul.f32 %v1110, 1.442695
      %v1152 = vpow.pop %v1151
      %v1153 = vmul.f32 %v1111, 1.442695
      %v1154 = vpow.pop %v1153
      %v1155 = vmul.f32 %v1112, 1.442695
      %v1156 = vpow.pop %v1155
      %v1157 = vmul.f32 %v1113, 1.442695
      %v1158 = vpow.pop %v1157
      %v1159 = vmul.f32 %v1114, 1.442695
      %v1160 = vpow.pop %v1159
      %v1161 = vmul.f32 %v1115, 1.442695
      %v1162 = vpow.pop %v1161
      %v1163 = vmul.f32 %v1116, 1.442695
      %v1164 = vpow.pop %v1163
      %v1165 = vmul.f32 %v1117, 1.442695
      %v1166 = vpow.pop %v1165
      %v1167 = vmul.f32 %v1118, 1.442695
      %v1168 = vpow.pop %v1167
      %v1169 = vmul.f32 %v1119, 1.442695
      %v1170 = vpow.pop %v1169
      %v1171 = vmul.f32 %v1120, 1.442695
      %v1172 = vpow.pop %v1171
      %v1173 = vmul.f32 %v1121, 1.442695
      %v1174 = vpow.pop %v1173
      %v1175 = vmul.f32 %v1122, 1.442695
      %v1176 = vpow.pop %v1175
      %v1177 = vmul.f32 %v1123, 1.442695
      %v1178 = vpow.pop %v1177
      %v1179 = vmul.f32 %v1124, 1.442695
      %v1180 = vpow.pop %v1179
      %v1181 = vmul.f32 %v1125, 1.442695
      %v1182 = vpow.pop %v1181
      %v1183 = vmul.f32 %v1126, 1.442695
      %v1184 = vpow.pop %v1183
      %v1185 = vmul.f32 %v1127, 1.442695
      %v1186 = vpow.pop %v1185
      %v1187 = vmul.f32 %v1128, 1.442695
      %v1188 = vpow.pop %v1187
      %v1189 = vmul.f32 %v1129, 1.442695
      %v1190 = vpow.pop %v1189
      %v1191 = vmul.f32 %v1130, 1.442695
      %v1192 = vpow.pop %v1191
      %v1193 = vmul.f32 %v1131, 1.442695
      %v1194 = vpow.pop %v1193
      %v1195 = vmul.f32 %v1132, 1.442695
      %v1196 = vpow.pop %v1195
      %v1197 = vadd.f32 %v1134, 1.0
      %v1198 = vadd.f32 %v1136, 1.0
      %v1199 = vadd.f32 %v1138, 1.0
      %v1200 = vadd.f32 %v1140, 1.0
      %v1201 = vadd.f32 %v1142, 1.0
      %v1202 = vadd.f32 %v1144, 1.0
      %v1203 = vadd.f32 %v1146, 1.0
      %v1204 = vadd.f32 %v1148, 1.0
      %v1205 = vadd.f32 %v1150, 1.0
      %v1206 = vadd.f32 %v1152, 1.0
      %v1207 = vadd.f32 %v1154, 1.0
      %v1208 = vadd.f32 %v1156, 1.0
      %v1209 = vadd.f32 %v1158, 1.0
      %v1210 = vadd.f32 %v1160, 1.0
      %v1211 = vadd.f32 %v1162, 1.0
      %v1212 = vadd.f32 %v1164, 1.0
      %v1213 = vadd.f32 %v1166, 1.0
      %v1214 = vadd.f32 %v1168, 1.0
      %v1215 = vadd.f32 %v1170, 1.0
      %v1216 = vadd.f32 %v1172, 1.0
      %v1217 = vadd.f32 %v1174, 1.0
      %v1218 = vadd.f32 %v1176, 1.0
      %v1219 = vadd.f32 %v1178, 1.0
      %v1220 = vadd.f32 %v1180, 1.0
      %v1221 = vadd.f32 %v1182, 1.0
      %v1222 = vadd.f32 %v1184, 1.0
      %v1223 = vadd.f32 %v1186, 1.0
      %v1224 = vadd.f32 %v1188, 1.0
      %v1225 = vadd.f32 %v1190, 1.0
      %v1226 = vadd.f32 %v1192, 1.0
      %v1227 = vadd.f32 %v1194, 1.0
      %v1228 = vadd.f32 %v1196, 1.0
      %v1229 = vrcp.pop %v1197
      %v1230 = vmul.f32 1.0, %v1229
      %v1231 = vrcp.pop %v1198
      %v1232 = vmul.f32 1.0, %v1231
      %v1233 = vrcp.pop %v1199
      %v1234 = vmul.f32 1.0, %v1233
      %v1235 = vrcp.pop %v1200
      %v1236 = vmul.f32 1.0, %v1235
      %v1237 = vrcp.pop %v1201
      %v1238 = vmul.f32 1.0, %v1237
      %v1239 = vrcp.pop %v1202
      %v1240 = vmul.f32 1.0, %v1239
      %v1241 = vrcp.pop %v1203
      %v1242 = vmul.f32 1.0, %v1241
      %v1243 = vrcp.pop %v1204
      %v1244 = vmul.f32 1.0, %v1243
      %v1245 = vrcp.pop %v1205
      %v1246 = vmul.f32 1.0, %v1245
      %v1247 = vrcp.pop %v1206
      %v1248 = vmul.f32 1.0, %v1247
      %v1249 = vrcp.pop %v1207
      %v1250 = vmul.f32 1.0, %v1249
      %v1251 = vrcp.pop %v1208
      %v1252 = vmul.f32 1.0, %v1251
      %v1253 = vrcp.pop %v1209
      %v1254 = vmul.f32 1.0, %v1253
      %v1255 = vrcp.pop %v1210
      %v1256 = vmul.f32 1.0, %v1255
      %v1257 = vrcp.pop %v1211
      %v1258 = vmul.f32 1.0, %v1257
      %v1259 = vrcp.pop %v1212
      %v1260 = vmul.f32 1.0, %v1259
      %v1261 = vrcp.pop %v1213
      %v1262 = vmul.f32 1.0, %v1261
      %v1263 = vrcp.pop %v1214
      %v1264 = vmul.f32 1.0, %v1263
      %v1265 = vrcp.pop %v1215
      %v1266 = vmul.f32 1.0, %v1265
      %v1267 = vrcp.pop %v1216
      %v1268 = vmul.f32 1.0, %v1267
      %v1269 = vrcp.pop %v1217
      %v1270 = vmul.f32 1.0, %v1269
      %v1271 = vrcp.pop %v1218
      %v1272 = vmul.f32 1.0, %v1271
      %v1273 = vrcp.pop %v1219
      %v1274 = vmul.f32 1.0, %v1273
      %v1275 = vrcp.pop %v1220
      %v1276 = vmul.f32 1.0, %v1275
      %v1277 = vrcp.pop %v1221
      %v1278 = vmul.f32 1.0, %v1277
      %v1279 = vrcp.pop %v1222
      %v1280 = vmul.f32 1.0, %v1279
      %v1281 = vrcp.pop %v1223
      %v1282 = vmul.f32 1.0, %v1281
      %v1283 = vrcp.pop %v1224
      %v1284 = vmul.f32 1.0, %v1283
      %v1285 = vrcp.pop %v1225
      %v1286 = vmul.f32 1.0, %v1285
      %v1287 = vrcp.pop %v1226
      %v1288 = vmul.f32 1.0, %v1287
      %v1289 = vrcp.pop %v1227
      %v1290 = vmul.f32 1.0, %v1289
      %v1291 = vrcp.pop %v1228
      %v1292 = vmul.f32 1.0, %v1291
      %vm1293 = vcmask 7168
      %1294 = vst.msk [vmem:[%s282] sm:$0xff] %vm1293, %v1230
      %1295 = vst.msk [vmem:[%s282 + $0x8] sm:$0xff] %vm1293, %v1232
      %1296 = vst.msk [vmem:[%s282 + $0x10] sm:$0xff] %vm1293, %v1234
      %1297 = vst.msk [vmem:[%s282 + $0x18] sm:$0xff] %vm1293, %v1236
      %1298 = vst.msk [vmem:[%s282 + $0x20] sm:$0xff] %vm1293, %v1238
      %1299 = vst.msk [vmem:[%s282 + $0x28] sm:$0xff] %vm1293, %v1240
      %1300 = vst.msk [vmem:[%s282 + $0x30] sm:$0xff] %vm1293, %v1242
      %1301 = vst.msk [vmem:[%s282 + $0x38] sm:$0xff] %vm1293, %v1244
      %1302 = vst.msk [vmem:[%s282 + $0x40] sm:$0xff] %vm1293, %v1246
      %1303 = vst.msk [vmem:[%s282 + $0x48] sm:$0xff] %vm1293, %v1248
      %1304 = vst.msk [vmem:[%s282 + $0x50] sm:$0xff] %vm1293, %v1250
      %1305 = vst.msk [vmem:[%s282 + $0x58] sm:$0xff] %vm1293, %v1252
      %1306 = vst.msk [vmem:[%s282 + $0x60] sm:$0xff] %vm1293, %v1254
      %1307 = vst.msk [vmem:[%s282 + $0x68] sm:$0xff] %vm1293, %v1256
      %1308 = vst.msk [vmem:[%s282 + $0x70] sm:$0xff] %vm1293, %v1258
      %1309 = vst.msk [vmem:[%s282 + $0x78] sm:$0xff] %vm1293, %v1260
      %1310 = vst.msk [vmem:[%s282 + $0x80] sm:$0xff] %vm1293, %v1262
      %1311 = vst.msk [vmem:[%s282 + $0x88] sm:$0xff] %vm1293, %v1264
      %1312 = vst.msk [vmem:[%s282 + $0x90] sm:$0xff] %vm1293, %v1266
      %1313 = vst.msk [vmem:[%s282 + $0x98] sm:$0xff] %vm1293, %v1268
      %1314 = vst.msk [vmem:[%s282 + $0xa0] sm:$0xff] %vm1293, %v1270
      %1315 = vst.msk [vmem:[%s282 + $0xa8] sm:$0xff] %vm1293, %v1272
      %1316 = vst.msk [vmem:[%s282 + $0xb0] sm:$0xff] %vm1293, %v1274
      %1317 = vst.msk [vmem:[%s282 + $0xb8] sm:$0xff] %vm1293, %v1276
      %1318 = vst.msk [vmem:[%s282 + $0xc0] sm:$0xff] %vm1293, %v1278
      %1319 = vst.msk [vmem:[%s282 + $0xc8] sm:$0xff] %vm1293, %v1280
      %1320 = vst.msk [vmem:[%s282 + $0xd0] sm:$0xff] %vm1293, %v1282
      %1321 = vst.msk [vmem:[%s282 + $0xd8] sm:$0xff] %vm1293, %v1284
      %1322 = vst.msk [vmem:[%s282 + $0xe0] sm:$0xff] %vm1293, %v1286
      %1323 = vst.msk [vmem:[%s282 + $0xe8] sm:$0xff] %vm1293, %v1288
      %1324 = vst.msk [vmem:[%s282 + $0xf0] sm:$0xff] %vm1293, %v1290
      %1325 = vst.msk [vmem:[%s282 + $0xf8] sm:$0xff] %vm1293, %v1292
      %s1326 = smul.u32 32, %s20
      %p1327 = scmp.lt.s32.totalorder %s1326, 127
      %s1328 = scalar_select %p1327, %s1326, 127
      %s1329 = smul.addr %s1328, 8
      %s1330 = scalar_lea.vmem %s7, %s1329
      // Predicated region
      $region49: #{nhl_mlp_forward.1} parent=47 // pred_check
        %p1331 = pneg %p190
      $region50: #{nhl_mlp_forward.1} parent=47 // pred_check_branch
        %1333 = sbr.rel (%p1331) target = $region52
      $region51: #{nhl_mlp_forward.1} parent=47 // pred_region
        %s1334 = smul.u32 32, %s20
      $region52: #{nhl_mlp_forward.1} parent=47 // pred_fallthru
        _
    $region48: #{nhl_mlp_forward.1} parent=5 // pred_fallthru
      _
    %p1335 = scmp.le.s32.totalorder 2, %s15
    // Predicated region
    $region53: #{nhl_mlp_forward.1} parent=5 // pred_check
      %p1336 = pneg %p1335
    $region54: #{nhl_mlp_forward.1} parent=5 // pred_check_branch
      %1338 = sbr.rel (%p1336) target = $region56
    $region55: #{nhl_mlp_forward.1} parent=5 // pred_region
      %s1339 = ssub.s32 %s15, 2
      // Predicated region
      $region57: #{nhl_mlp_forward.1} parent=55 // pred_check
        %p1340 = pneg %p196
      $region58: #{nhl_mlp_forward.1} parent=55 // pred_check_branch
        %1342 = sbr.rel (%p1340) target = $region60
      $region59: #{nhl_mlp_forward.1} parent=55 // pred_region
        %s1343 = smul.u32 32, %s21
        %p1344 = scmp.lt.s32.totalorder %s1343, 127
        %s1345 = scalar_select %p1344, %s1343, 127
        %s1346 = smul.addr %s1345, 8
        %s1347 = scalar_lea.vmem %s7, %s1346
      $region60: #{nhl_mlp_forward.1} parent=55 // pred_fallthru
        _
    $region56: #{nhl_mlp_forward.1} parent=5 // pred_fallthru
      _
  $region6: #{nhl_mlp_forward.1} parent=0 // loop_footer
    %s19 = sadd.s32 1, %s15
  $region7: #{nhl_mlp_forward.1} parent=0 // loop_footer_branch
    %14 = sbr.rel target = $region3
  $region8: #{nhl_mlp_forward.1} parent=0 // loop_exit
    _

</llo_original>
